<compile_context>
chip_gen: v7x
topology: tpu7x:2x2x1
jax: 0.10.0
libtpu: 0.0.40
codegen_flags: <defaults>
</compile_context>

<pallas_src>
import functools
import math

import jax
import jax.numpy as jnp
from jax.experimental import pallas as pl
from jax.experimental.pallas import tpu as pltpu


def _round_up(n: int, m: int) -> int:
    return ((n + m - 1) // m) * m


def _mlp_kernel_body(num_linears: int, negative_slope: float, *refs):
    """StateNet forward for one batch tile.

    refs = (x_ref, w0, b0, w1, b1, ..., w_{L-1}, b_{L-1}, out_ref)

    Layer structure (matches the PyTorch nn.Sequential):
        Linear0                                  (obs -> hidden, NO activation)
        [Linear_i ; LeakyReLU]  x (num_layers-1) (hidden -> hidden)
        Linear_last                              (hidden -> state_rep_dim, padded to 128)
    """
    x_ref = refs[0]
    out_ref = refs[-1]
    wb = refs[1:-1]
    assert len(wb) == 2 * num_linears

    h = x_ref[...]  # f32 activations

    # First linear: no activation afterwards (next module is another Linear).
    w0 = wb[0][...]
    b0 = wb[1][...]
    h = jnp.dot(h.astype(w0.dtype), w0, preferred_element_type=jnp.float32) + b0

    # Middle linears: each followed by LeakyReLU (f32 elementwise — v5e-safe).
    for li in range(1, num_linears - 1):
        w = wb[2 * li][...]
        b = wb[2 * li + 1][...]
        h = jnp.dot(h.astype(w.dtype), w, preferred_element_type=jnp.float32) + b
        h = jnp.where(h > 0, h, negative_slope * h)

    # Final linear: no activation.  Output columns are padded to a multiple of
    # 128 (zero weight/bias columns) so this store is lane-dense.
    w_last = wb[2 * (num_linears - 1)][...]
    b_last = wb[2 * (num_linears - 1) + 1][...]
    out = jnp.dot(h.astype(w_last.dtype), w_last,
                  preferred_element_type=jnp.float32) + b_last
    out_ref[...] = out.astype(out_ref.dtype)


@functools.partial(
    jax.jit,
    static_argnames=("num_linears", "negative_slope", "state_rep_dim"))
def _statenet_forward(x, flat_params, *, num_linears, negative_slope,
                      state_rep_dim):
    """Jitted (and therefore cached per-shape) forward pass.

    flat_params: tuple (w0, b0, w1, b1, ...) with bf16 weights of shape
    (in_dim, out_dim), f32 biases of shape (1, out_dim); the last layer's
    weight/bias are pre-padded to a 128-multiple of output columns.
    """
    batch, obs = x.shape
    out_pad = flat_params[-1].shape[1]  # lane-dense padded output width

    # Batch tiling: one tile if small, otherwise 512-row tiles so BlockSpec
    # double-buffers activation DMA against MXU work.
    TB_MAX = 512
    if batch <= TB_MAX:
        tb = _round_up(max(batch, 8), 8)
    else:
        tb = TB_MAX
    padded_batch = _round_up(batch, tb)
    if padded_batch != batch:
        x = jnp.pad(x, ((0, padded_batch - batch), (0, 0)))

    grid = (padded_batch // tb,)

    # x / out tiled over batch; weights use a constant index_map so they are
    # DMA'd once and stay resident in VMEM across all batch tiles.
    in_specs = [pl.BlockSpec((tb, obs), lambda i: (i, 0))]
    for p in flat_params:
        in_specs.append(pl.BlockSpec(p.shape, lambda i: (0, 0)))
    out_specs = pl.BlockSpec((tb, out_pad), lambda i: (i, 0))

    kernel = functools.partial(_mlp_kernel_body, num_linears, negative_slope)

    # TODO(synk): if hidden_size is ever scaled to the 2-4K range, tile the K
    # (reduction) axis with an f32 accumulator scratch + pl.when init/finalize
    # instead of full-array weight blocks (v7x VMEM is only 64 MiB).
    out = pl.pallas_call(
        kernel,
        out_shape=jax.ShapeDtypeStruct((padded_batch, out_pad), jnp.float32),
        grid=grid,
        in_specs=in_specs,
        out_specs=out_specs,
        compiler_params=pltpu.CompilerParams(
            # Batch tiles are independent -> shard across both TCs on v7x.
            dimension_semantics=("parallel",)),
    )(x, *flat_params)

    return out[:batch, :state_rep_dim]


class StateNetPallas:
    """Pallas/TPU implementation of StateNet's forward pass."""

    NEGATIVE_SLOPE = 0.01  # nn.LeakyReLU default

    def __init__(self, state_rep_dim, hidden_size, num_layers, obs_size,
                 key=jax.random.PRNGKey(0)):
        self.state_rep_dim = state_rep_dim
        self.hidden_size = hidden_size
        self.num_layers = num_layers
        self.obs_size = obs_size

        # Linear layer dims, in order (mirrors the PyTorch __init__).
        dims = [(obs_size, hidden_size)]
        for _ in range(num_layers - 1):
            dims.append((hidden_size, hidden_size))
        dims.append((hidden_size, state_rep_dim))
        self.dims = dims
        self.num_linears = len(dims)

        # Deterministic init mimicking PyTorch nn.Linear defaults
        # (uniform(-1/sqrt(fan_in), 1/sqrt(fan_in)) for W and b).
        # Weights stored as bf16 (halves weight DMA bytes, native MXU input
        # path); biases stay f32.
        out_pad = _round_up(state_rep_dim, 128)
        self._out_pad = out_pad
        flat = []
        for idx, (fan_in, fan_out) in enumerate(dims):
            key, kw, kb = jax.random.split(key, 3)
            bound = 1.0 / math.sqrt(fan_in)
            w = jax.random.uniform(kw, (fan_in, fan_out), jnp.float32,
                                   minval=-bound, maxval=bound)
            b = jax.random.uniform(kb, (1, fan_out), jnp.float32,
                                   minval=-bound, maxval=bound)
            if idx == self.num_linears - 1 and fan_out != out_pad:
                # Pad the final layer's output columns so the kernel's output
                # store is lane-dense; padded columns are exactly zero.
                w = jnp.pad(w, ((0, 0), (0, out_pad - fan_out)))
                b = jnp.pad(b, ((0, 0), (0, out_pad - fan_out)))
            flat.append(w.astype(jnp.bfloat16))
            flat.append(b)
        self.flat_params = tuple(flat)

    def __call__(self, x):
        assert x.ndim == 2 and x.shape[1] == self.obs_size
        # _statenet_forward is jitted: the pallas_call is traced/compiled once
        # per batch shape and cached; per-call host cost is just dispatch.
        return _statenet_forward(
            x, self.flat_params,
            num_linears=self.num_linears,
            negative_slope=self.NEGATIVE_SLOPE,
            state_rep_dim=self.state_rep_dim)

    # Pure-JAX reference (same bf16-weight / f32-accumulate math) for checks.
    def reference(self, x):
        wbs = self.flat_params

        def layer(h, w, b):
            return jnp.dot(h.astype(w.dtype), w,
                           preferred_element_type=jnp.float32) + b

        h = layer(x, wbs[0], wbs[1])
        for li in range(1, self.num_linears - 1):
            h = layer(h, wbs[2 * li], wbs[2 * li + 1])
            h = jnp.where(h > 0, h, self.NEGATIVE_SLOPE * h)
        h = layer(h, wbs[-2], wbs[-1])
        return h[:, :self.state_rep_dim]


if __name__ == "__main__":
    # Small shapes consistent with the module's forward:
    #   batch=8, obs_size=32, hidden_size=32, num_layers=3, state_rep_dim=16
    batch = 8
    obs_size = 32
    hidden_size = 32
    num_layers = 3
    state_rep_dim = 16

    key = jax.random.PRNGKey(0)
    key, kx = jax.random.split(key)
    x = jax.random.normal(kx, (batch, obs_size), jnp.float32)

    net = StateNetPallas(state_rep_dim, hidden_size, num_layers, obs_size,
                         key=jax.random.PRNGKey(0))

    out = net(x)
    out = jax.block_until_ready(out)

    # Second call exercises the cached compiled path (no retrace).
    out2 = jax.block_until_ready(net(x))

    ref = net.reference(x)
    assert out.shape == (batch, state_rep_dim)
    assert jnp.allclose(out, ref, atol=1e-4, rtol=1e-4), "mismatch vs reference"
    assert jnp.allclose(out, out2), "cached call mismatch"

    print("KERNEL_OK")
</pallas_src>

<mosaic_0001>
module attributes {stable_mosaic.version = 11 : i64} {
  func.func @_mlp_kernel_body(%arg0: i32, %arg1: memref<8x32xf32, #tpu.memory_space<vmem>>, %arg2: memref<32x32xbf16, #tpu.memory_space<vmem>>, %arg3: memref<1x32xf32, #tpu.memory_space<vmem>>, %arg4: memref<32x32xbf16, #tpu.memory_space<vmem>>, %arg5: memref<1x32xf32, #tpu.memory_space<vmem>>, %arg6: memref<32x32xbf16, #tpu.memory_space<vmem>>, %arg7: memref<1x32xf32, #tpu.memory_space<vmem>>, %arg8: memref<32x128xbf16, #tpu.memory_space<vmem>>, %arg9: memref<1x128xf32, #tpu.memory_space<vmem>>, %arg10: memref<8x128xf32, #tpu.memory_space<vmem>>) attributes {dimension_semantics = [#tpu.dimension_semantics<parallel>], iteration_bounds = array<i64: 1>, scalar_prefetch = 0 : i64, scratch_operands = 0 : i64, tpu.core_type = #tpu.core_type<tc>, window_params = [{transform_indices = @transform_0, window_bounds = array<i64: 8, 32>}, {pipeline_mode = #tpu.pipeline_mode<synchronous>, transform_indices = @transform_1, window_bounds = array<i64: 32, 32>}, {pipeline_mode = #tpu.pipeline_mode<synchronous>, transform_indices = @transform_2, window_bounds = array<i64: 1, 32>}, {pipeline_mode = #tpu.pipeline_mode<synchronous>, transform_indices = @transform_3, window_bounds = array<i64: 32, 32>}, {pipeline_mode = #tpu.pipeline_mode<synchronous>, transform_indices = @transform_4, window_bounds = array<i64: 1, 32>}, {pipeline_mode = #tpu.pipeline_mode<synchronous>, transform_indices = @transform_5, window_bounds = array<i64: 32, 32>}, {pipeline_mode = #tpu.pipeline_mode<synchronous>, transform_indices = @transform_6, window_bounds = array<i64: 1, 32>}, {pipeline_mode = #tpu.pipeline_mode<synchronous>, transform_indices = @transform_7, window_bounds = array<i64: 32, 128>}, {pipeline_mode = #tpu.pipeline_mode<synchronous>, transform_indices = @transform_8, window_bounds = array<i64: 1, 128>}, {transform_indices = @transform_9, window_bounds = array<i64: 8, 128>}]} {
    %c0 = arith.constant 0 : index
    %c0_0 = arith.constant 0 : index
    %0 = vector.load %arg1[%c0, %c0_0] : memref<8x32xf32, #tpu.memory_space<vmem>>, vector<8x32xf32>
    %c0_1 = arith.constant 0 : index
    %c0_2 = arith.constant 0 : index
    %1 = vector.load %arg2[%c0_1, %c0_2] : memref<32x32xbf16, #tpu.memory_space<vmem>>, vector<32x32xbf16>
    %c0_3 = arith.constant 0 : index
    %c0_4 = arith.constant 0 : index
    %2 = vector.load %arg3[%c0_3, %c0_4] : memref<1x32xf32, #tpu.memory_space<vmem>>, vector<1x32xf32>
    %3 = arith.truncf %0 : vector<8x32xf32> to vector<8x32xbf16>
    %cst = arith.constant dense<0.000000e+00> : vector<8x32xf32>
    %4 = tpu.matmul %3, %1, %cst {dimension_numbers = #tpu.dot_dimension_numbers<[1], [0], [0], [1], [0, 0, 1, 1], [], []>} : vector<8x32xbf16>, vector<32x32xbf16>, vector<8x32xf32> -> vector<8x32xf32>
    %5 = vector.broadcast %2 : vector<1x32xf32> to vector<8x32xf32>
    %6 = arith.addf %4, %5 : vector<8x32xf32>
    %c0_5 = arith.constant 0 : index
    %c0_6 = arith.constant 0 : index
    %7 = vector.load %arg4[%c0_5, %c0_6] : memref<32x32xbf16, #tpu.memory_space<vmem>>, vector<32x32xbf16>
    %c0_7 = arith.constant 0 : index
    %c0_8 = arith.constant 0 : index
    %8 = vector.load %arg5[%c0_7, %c0_8] : memref<1x32xf32, #tpu.memory_space<vmem>>, vector<1x32xf32>
    %9 = arith.truncf %6 : vector<8x32xf32> to vector<8x32xbf16>
    %cst_9 = arith.constant dense<0.000000e+00> : vector<8x32xf32>
    %10 = tpu.matmul %9, %7, %cst_9 {dimension_numbers = #tpu.dot_dimension_numbers<[1], [0], [0], [1], [0, 0, 1, 1], [], []>} : vector<8x32xbf16>, vector<32x32xbf16>, vector<8x32xf32> -> vector<8x32xf32>
    %11 = vector.broadcast %8 : vector<1x32xf32> to vector<8x32xf32>
    %12 = arith.addf %10, %11 : vector<8x32xf32>
    %cst_10 = arith.constant 0.000000e+00 : f32
    %13 = vector.broadcast %cst_10 : f32 to vector<8x32xf32>
    %14 = arith.cmpf ogt, %12, %13 : vector<8x32xf32>
    %cst_11 = arith.constant 0.00999999977 : f32
    %15 = vector.broadcast %cst_11 : f32 to vector<8x32xf32>
    %16 = arith.mulf %15, %12 : vector<8x32xf32>
    %17 = arith.select %14, %12, %16 : vector<8x32xi1>, vector<8x32xf32>
    %c0_12 = arith.constant 0 : index
    %c0_13 = arith.constant 0 : index
    %18 = vector.load %arg6[%c0_12, %c0_13] : memref<32x32xbf16, #tpu.memory_space<vmem>>, vector<32x32xbf16>
    %c0_14 = arith.constant 0 : index
    %c0_15 = arith.constant 0 : index
    %19 = vector.load %arg7[%c0_14, %c0_15] : memref<1x32xf32, #tpu.memory_space<vmem>>, vector<1x32xf32>
    %20 = arith.truncf %17 : vector<8x32xf32> to vector<8x32xbf16>
    %cst_16 = arith.constant dense<0.000000e+00> : vector<8x32xf32>
    %21 = tpu.matmul %20, %18, %cst_16 {dimension_numbers = #tpu.dot_dimension_numbers<[1], [0], [0], [1], [0, 0, 1, 1], [], []>} : vector<8x32xbf16>, vector<32x32xbf16>, vector<8x32xf32> -> vector<8x32xf32>
    %22 = vector.broadcast %19 : vector<1x32xf32> to vector<8x32xf32>
    %23 = arith.addf %21, %22 : vector<8x32xf32>
    %cst_17 = arith.constant 0.000000e+00 : f32
    %24 = vector.broadcast %cst_17 : f32 to vector<8x32xf32>
    %25 = arith.cmpf ogt, %23, %24 : vector<8x32xf32>
    %cst_18 = arith.constant 0.00999999977 : f32
    %26 = vector.broadcast %cst_18 : f32 to vector<8x32xf32>
    %27 = arith.mulf %26, %23 : vector<8x32xf32>
    %28 = arith.select %25, %23, %27 : vector<8x32xi1>, vector<8x32xf32>
    %c0_19 = arith.constant 0 : index
    %c0_20 = arith.constant 0 : index
    %29 = vector.load %arg8[%c0_19, %c0_20] : memref<32x128xbf16, #tpu.memory_space<vmem>>, vector<32x128xbf16>
    %c0_21 = arith.constant 0 : index
    %c0_22 = arith.constant 0 : index
    %30 = vector.load %arg9[%c0_21, %c0_22] : memref<1x128xf32, #tpu.memory_space<vmem>>, vector<1x128xf32>
    %31 = arith.truncf %28 : vector<8x32xf32> to vector<8x32xbf16>
    %cst_23 = arith.constant dense<0.000000e+00> : vector<8x128xf32>
    %32 = tpu.matmul %31, %29, %cst_23 {dimension_numbers = #tpu.dot_dimension_numbers<[1], [0], [0], [1], [0, 0, 1, 1], [], []>} : vector<8x32xbf16>, vector<32x128xbf16>, vector<8x128xf32> -> vector<8x128xf32>
    %33 = vector.broadcast %30 : vector<1x128xf32> to vector<8x128xf32>
    %34 = arith.addf %32, %33 : vector<8x128xf32>
    %c0_24 = arith.constant 0 : index
    %c0_25 = arith.constant 0 : index
    %35 = vector.load %arg10[%c0_24, %c0_25] : memref<8x128xf32, #tpu.memory_space<vmem>>, vector<8x128xf32>
    tpu.vector_store %arg10[%c0_24, %c0_25], %34 {strides = array<i32>} : memref<8x128xf32, #tpu.memory_space<vmem>>, vector<8x128xf32>,
    return
  }
  func.func @transform_0(%arg0: i32) -> (i32, i32) {
    %c0_i32 = arith.constant 0 : i32
    %c0_i32_0 = arith.constant 0 : i32
    return %arg0, %c0_i32 : i32, i32
  }
  func.func @transform_1(%arg0: i32) -> (i32, i32) {
    %c0_i32 = arith.constant 0 : i32
    %c0_i32_0 = arith.constant 0 : i32
    %c0_i32_1 = arith.constant 0 : i32
    return %c0_i32, %c0_i32_0 : i32, i32
  }
  func.func @transform_2(%arg0: i32) -> (i32, i32) {
    %c0_i32 = arith.constant 0 : i32
    %c0_i32_0 = arith.constant 0 : i32
    %c0_i32_1 = arith.constant 0 : i32
    return %c0_i32, %c0_i32_0 : i32, i32
  }
  func.func @transform_3(%arg0: i32) -> (i32, i32) {
    %c0_i32 = arith.constant 0 : i32
    %c0_i32_0 = arith.constant 0 : i32
    %c0_i32_1 = arith.constant 0 : i32
    return %c0_i32, %c0_i32_0 : i32, i32
  }
  func.func @transform_4(%arg0: i32) -> (i32, i32) {
    %c0_i32 = arith.constant 0 : i32
    %c0_i32_0 = arith.constant 0 : i32
    %c0_i32_1 = arith.constant 0 : i32
    return %c0_i32, %c0_i32_0 : i32, i32
  }
  func.func @transform_5(%arg0: i32) -> (i32, i32) {
    %c0_i32 = arith.constant 0 : i32
    %c0_i32_0 = arith.constant 0 : i32
    %c0_i32_1 = arith.constant 0 : i32
    return %c0_i32, %c0_i32_0 : i32, i32
  }
  func.func @transform_6(%arg0: i32) -> (i32, i32) {
    %c0_i32 = arith.constant 0 : i32
    %c0_i32_0 = arith.constant 0 : i32
    %c0_i32_1 = arith.constant 0 : i32
    return %c0_i32, %c0_i32_0 : i32, i32
  }
  func.func @transform_7(%arg0: i32) -> (i32, i32) {
    %c0_i32 = arith.constant 0 : i32
    %c0_i32_0 = arith.constant 0 : i32
    %c0_i32_1 = arith.constant 0 : i32
    return %c0_i32, %c0_i32_0 : i32, i32
  }
  func.func @transform_8(%arg0: i32) -> (i32, i32) {
    %c0_i32 = arith.constant 0 : i32
    %c0_i32_0 = arith.constant 0 : i32
    %c0_i32_1 = arith.constant 0 : i32
    return %c0_i32, %c0_i32_0 : i32, i32
  }
  func.func @transform_9(%arg0: i32) -> (i32, i32) {
    %c0_i32 = arith.constant 0 : i32
    %c0_i32_0 = arith.constant 0 : i32
    return %arg0, %c0_i32 : i32, i32
  }
}

</mosaic_0001>

<llo_original>
// kernel: _statenet_forward.1
$region0: #{_statenet_forward.1}
  #allocation0 [shape = 'u32[]', space=smem, size = 0x4, offset = 0x4, fixed_abs, tag = 'smem constant byte address 0x4 - core index']
  #allocation1 [shape = 'u32[144,128]{1,0:T(1,128)}', space=vmem, size = 0x12000, scoped, tag = 'internal scratch']
  %s0 = inlined_call_operand.hbm [shape: f32[8,32], index: 0, kind: input, shape index: {}]
  %s1 = inlined_call_operand.hbm [shape: bf16[32,32], index: 1, kind: input, shape index: {}]
  %s2 = inlined_call_operand.vmem [shape: f32[1,32], index: 2, kind: input, shape index: {}]
  %s3 = inlined_call_operand.hbm [shape: bf16[32,32], index: 3, kind: input, shape index: {}]
  %s4 = inlined_call_operand.vmem [shape: f32[1,32], index: 4, kind: input, shape index: {}]
  %s5 = inlined_call_operand.vmem [shape: bf16[32,32], index: 5, kind: input, shape index: {}]
  %s6 = inlined_call_operand.vmem [shape: f32[1,32], index: 6, kind: input, shape index: {}]
  %s7 = inlined_call_operand.hbm [shape: bf16[32,128], index: 7, kind: input, shape index: {}]
  %s8 = inlined_call_operand.vmem [shape: f32[1,128], index: 8, kind: input, shape index: {}]
  %s9 = inlined_call_operand.hbm [shape: f32[8,128], index: 9, kind: output, shape index: {}]
  %s10 = sld [smem:[#allocation0]]
  $region62: #{_statenet_forward.1} parent=0
    _
  %s12 = ssub.s32 1, %s10
  %s13 = scalar_select 0, %s12, %s10
  $region1: #{_statenet_forward.1} parent=0
    #allocation2 [shape = 'u8[4096]{0}', space=vmem, size = 0x1000, scoped, tag = 'input window, operand 0, single buffered']
    #allocation3 [shape = 's32[1]{0}', space=sflag, size = 0x4, scoped, tag = 'scoped memory for _statenet_forward.1']
    #allocation4 [shape = 's32[1]{0}', space=sflag, size = 0x4, scoped, tag = 'scoped memory for _statenet_forward.1']
    #allocation5 [shape = 'u8[8192]{0}', space=vmem, size = 0x2000, scoped, tag = 'input window, operand 1, single buffered']
    #allocation6 [shape = 's32[1]{0}', space=sflag, size = 0x4, scoped, tag = 'scoped memory for _statenet_forward.1']
    #allocation7 [shape = 'u8[8192]{0}', space=vmem, size = 0x2000, scoped, tag = 'input window, operand 3, single buffered']
    #allocation8 [shape = 'u8[8192]{0}', space=vmem, size = 0x2000, scoped, tag = 'input window, operand 7, single buffered']
    #allocation9 [shape = 's32[1]{0}', space=sflag, size = 0x4, scoped, tag = 'scoped memory for _statenet_forward.1']
    #allocation10 [shape = 'u8[4096]{0}', space=vmem, size = 0x1000, scoped, tag = 'output window, operand 0, single buffered']
    %14 = vsyncpa [#allocation3], 0
    %15 = vsyncpa [#allocation6], 0
    %16 = vsyncpa [#allocation9], 0
    %17 = vsyncpa [#allocation4], 0
    // Predicated region
    $region2: #{_statenet_forward.1} parent=1 // pred_check
      _
    $region3: #{_statenet_forward.1} parent=1 // pred_check_branch
      %19 = sbr.rel (0) target = $region5
    $region4: #{_statenet_forward.1} parent=1 // pred_region
      %s21 = ssub.s32 128, 128
      %22 = vsyncadd [#allocation3], %s21
      %s24 = sshll.u32 [#allocation2], 4
      %s25 = int_to_ptr.vmem [resolvable:$true] %s24
      %27 = dma.hbm_to_vmem [thread:$0]  %s0, 128, %s25, [#allocation3]
    $region5: #{_statenet_forward.1} parent=1 // pred_fallthru
      _
    // Predicated region
    $region6: #{_statenet_forward.1} parent=1 // pred_check
      _
    $region7: #{_statenet_forward.1} parent=1 // pred_check_branch
      %29 = sbr.rel (0) target = $region9
    $region8: #{_statenet_forward.1} parent=1 // pred_region
      %s31 = ssub.s32 256, 256
      %32 = vsyncadd [#allocation6], %s31
      %s33 = sshll.u32 [#allocation5], 4
      %s34 = int_to_ptr.vmem [resolvable:$true] %s33
      %39 = dma.hbm_to_vmem [thread:$0]  %s1, 256, %s34, [#allocation6], 64, 64, 4
    $region9: #{_statenet_forward.1} parent=1 // pred_fallthru
      _
    // Predicated region
    $region10: #{_statenet_forward.1} parent=1 // pred_check
      _
    $region11: #{_statenet_forward.1} parent=1 // pred_check_branch
      %41 = sbr.rel (0) target = $region13
    $region12: #{_statenet_forward.1} parent=1 // pred_region
      _
    $region13: #{_statenet_forward.1} parent=1 // pred_fallthru
      _
    // Predicated region
    $region14: #{_statenet_forward.1} parent=1 // pred_check
      _
    $region15: #{_statenet_forward.1} parent=1 // pred_check_branch
      %43 = sbr.rel (0) target = $region17
    $region16: #{_statenet_forward.1} parent=1 // pred_region
      %s45 = ssub.s32 256, 256
      %46 = vsyncadd [#allocation6], %s45
      %s47 = sshll.u32 [#allocation7], 4
      %s48 = int_to_ptr.vmem [resolvable:$true] %s47
      %53 = dma.hbm_to_vmem [thread:$0]  %s3, 256, %s48, [#allocation6], 64, 64, 4
    $region17: #{_statenet_forward.1} parent=1 // pred_fallthru
      _
    // Predicated region
    $region18: #{_statenet_forward.1} parent=1 // pred_check
      _
    $region19: #{_statenet_forward.1} parent=1 // pred_check_branch
      %55 = sbr.rel (0) target = $region21
    $region20: #{_statenet_forward.1} parent=1 // pred_region
      _
    $region21: #{_statenet_forward.1} parent=1 // pred_fallthru
      _
    // Predicated region
    $region22: #{_statenet_forward.1} parent=1 // pred_check
      _
    $region23: #{_statenet_forward.1} parent=1 // pred_check_branch
      %57 = sbr.rel (0) target = $region25
    $region24: #{_statenet_forward.1} parent=1 // pred_region
      _
    $region25: #{_statenet_forward.1} parent=1 // pred_fallthru
      _
    // Predicated region
    $region26: #{_statenet_forward.1} parent=1 // pred_check
      _
    $region27: #{_statenet_forward.1} parent=1 // pred_check_branch
      %59 = sbr.rel (0) target = $region29
    $region28: #{_statenet_forward.1} parent=1 // pred_region
      _
    $region29: #{_statenet_forward.1} parent=1 // pred_fallthru
      _
    // Predicated region
    $region30: #{_statenet_forward.1} parent=1 // pred_check
      _
    $region31: #{_statenet_forward.1} parent=1 // pred_check_branch
      %61 = sbr.rel (0) target = $region33
    $region32: #{_statenet_forward.1} parent=1 // pred_region
      %s63 = ssub.s32 256, 256
      %64 = vsyncadd [#allocation9], %s63
      %s65 = sshll.u32 [#allocation8], 4
      %s66 = int_to_ptr.vmem [resolvable:$true] %s65
      %71 = dma.hbm_to_vmem [thread:$0]  %s7, 256, %s66, [#allocation9], 64, 64, 4
    $region33: #{_statenet_forward.1} parent=1 // pred_fallthru
      _
    // Predicated region
    $region34: #{_statenet_forward.1} parent=1 // pred_check
      _
    $region35: #{_statenet_forward.1} parent=1 // pred_check_branch
      %73 = sbr.rel (0) target = $region37
    $region36: #{_statenet_forward.1} parent=1 // pred_region
      _
    $region37: #{_statenet_forward.1} parent=1 // pred_fallthru
      _
    // Predicated region
    $region38: #{_statenet_forward.1} parent=1 // pred_check
      _
    $region39: #{_statenet_forward.1} parent=1 // pred_check_branch
      %75 = sbr.rel (0) target = $region41
    $region40: #{_statenet_forward.1} parent=1 // pred_region
      %76 = dma.done [#allocation3], 128
    $region41: #{_statenet_forward.1} parent=1 // pred_fallthru
      _
    // Predicated region
    $region42: #{_statenet_forward.1} parent=1 // pred_check
      _
    $region43: #{_statenet_forward.1} parent=1 // pred_check_branch
      %78 = sbr.rel (0) target = $region45
    $region44: #{_statenet_forward.1} parent=1 // pred_region
      %79 = dma.done [#allocation6], 256
    $region45: #{_statenet_forward.1} parent=1 // pred_fallthru
      _
    // Predicated region
    $region46: #{_statenet_forward.1} parent=1 // pred_check
      _
    $region47: #{_statenet_forward.1} parent=1 // pred_check_branch
      %81 = sbr.rel (0) target = $region49
    $region48: #{_statenet_forward.1} parent=1 // pred_region
      %82 = dma.done [#allocation6], 256
    $region49: #{_statenet_forward.1} parent=1 // pred_fallthru
      _
    // Predicated region
    $region50: #{_statenet_forward.1} parent=1 // pred_check
      _
    $region51: #{_statenet_forward.1} parent=1 // pred_check_branch
      %84 = sbr.rel (0) target = $region53
    $region52: #{_statenet_forward.1} parent=1 // pred_region
      %85 = dma.done [#allocation9], 256
    $region53: #{_statenet_forward.1} parent=1 // pred_fallthru
      _
    %v87 = vld [vmem:[#allocation2] sm:$0xff]
    %v88 = vld [vmem:[#allocation5] sm:$0xf]
    %v89 = vld [vmem:[#allocation5 + $0x4] sm:$0xf]
    %v90 = vld [vmem:[#allocation5 + $0x8] sm:$0xf]
    %v91 = vld [vmem:[#allocation5 + $0xc] sm:$0xf]
    %v92 = vld [vmem:[%s2] sm:$0x1]
    %v93 = vpack.c.bf16 %v87, %v87
    %v95 = vlaneseq
    %v96 = vshrl.u32 %v95, 7
    %v97 = vsub.s32 0, %v96
    %v98 = vrot.slane %v92, %v97
    %v104 = vunpack.c.l.b16 %v88
    %v105 = vunpack.c.l.b16 %v89
    %v106 = vunpack.c.l.b16 %v90
    %v107 = vunpack.c.l.b16 %v91
    %v108 = vpack.c.b16 %v105, %v104
    %v109 = vpack.c.b16 %v107, %v106
    %vm112 = vcmask 261120
    %v114 = vsel %vm112, %v93, 0
    %116 = vmatprep.subr.bf16.mxu0 0
    %117 = vmatpush1.bf16.msra.mxu0 %v108
    %118 = vmatprep.subr.bf16.mxu0 0
    %119 = vmatpush1.bf16.msra.mxu0 %v109
    %120 = vmatprep.subr.bf16.mxu0 0
    %121 = vmatpush1.bf16.msra.mxu0 0
    %122 = vmatprep.subr.bf16.mxu0 0
    %123 = vmatpush1.bf16.msra.mxu0 0
    %124 = vmatprep.subr.bf16.mxu0 0
    %125 = vmatpush1.bf16.msra.mxu0 0
    %126 = vmatprep.subr.bf16.mxu0 0
    %127 = vmatpush1.bf16.msra.mxu0 0
    %128 = vmatprep.subr.bf16.mxu0 0
    %129 = vmatpush1.bf16.msra.mxu0 0
    %130 = vmatprep.subr.bf16.mxu0 0
    %131 = vmatpush1.bf16.msra.mxu0 0
    %132 = vmatprep.subr.bf16.mxu0 0
    %133 = vmatpush1.bf16.msra.mxu0 0
    %134 = vmatprep.subr.bf16.mxu0 0
    %135 = vmatpush1.bf16.msra.mxu0 0
    %136 = vmatprep.subr.bf16.mxu0 0
    %137 = vmatpush1.bf16.msra.mxu0 0
    %138 = vmatprep.subr.bf16.mxu0 0
    %139 = vmatpush1.bf16.msra.mxu0 0
    %140 = vmatprep.subr.bf16.mxu0 0
    %141 = vmatpush1.bf16.msra.mxu0 0
    %142 = vmatprep.subr.bf16.mxu0 0
    %143 = vmatpush1.bf16.msra.mxu0 0
    %144 = vmatprep.subr.bf16.mxu0 0
    %145 = vmatpush1.bf16.msra.mxu0 0
    %146 = vmatprep.subr.bf16.mxu0 0
    %147 = vmatpush1.bf16.msra.mxu0 0
    %148 = vmatprep.mubr.bf16.mxu0 0
    %149 = vmatmul.mubr.bf16.gmra.mrb[0].mxu0 %v114
    %v150 = vpop.f32.mrb[0].mxu0
    %v151 = vadd.f32 %v98, %v150
    %v152 = vpop.f32.mrb[0].mxu0
    %v153 = vpop.f32.mrb[0].mxu0
    %v154 = vpop.f32.mrb[0].mxu0
    %155 = vdwg.mxu0
    %v156 = vld [vmem:[#allocation7] sm:$0xf]
    %v157 = vld [vmem:[#allocation7 + $0x4] sm:$0xf]
    %v158 = vld [vmem:[#allocation7 + $0x8] sm:$0xf]
    %v159 = vld [vmem:[#allocation7 + $0xc] sm:$0xf]
    %v160 = vld [vmem:[%s4] sm:$0x1]
    %v161 = vpack.c.bf16 %v151, %v151
    %v163 = vlaneseq
    %v164 = vshrl.u32 %v163, 7
    %v165 = vsub.s32 0, %v164
    %v166 = vrot.slane %v160, %v165
    %v172 = vunpack.c.l.b16 %v156
    %v173 = vunpack.c.l.b16 %v157
    %v174 = vunpack.c.l.b16 %v158
    %v175 = vunpack.c.l.b16 %v159
    %v176 = vpack.c.b16 %v173, %v172
    %v177 = vpack.c.b16 %v175, %v174
    %v181 = vsel %vm112, %v161, 0
    %183 = vmatprep.subr.bf16.mxu0 0
    %184 = vmatpush1.bf16.msra.mxu0 %v176
    %185 = vmatprep.subr.bf16.mxu0 0
    %186 = vmatpush1.bf16.msra.mxu0 %v177
    %187 = vmatprep.subr.bf16.mxu0 0
    %188 = vmatpush1.bf16.msra.mxu0 0
    %189 = vmatprep.subr.bf16.mxu0 0
    %190 = vmatpush1.bf16.msra.mxu0 0
    %191 = vmatprep.subr.bf16.mxu0 0
    %192 = vmatpush1.bf16.msra.mxu0 0
    %193 = vmatprep.subr.bf16.mxu0 0
    %194 = vmatpush1.bf16.msra.mxu0 0
    %195 = vmatprep.subr.bf16.mxu0 0
    %196 = vmatpush1.bf16.msra.mxu0 0
    %197 = vmatprep.subr.bf16.mxu0 0
    %198 = vmatpush1.bf16.msra.mxu0 0
    %199 = vmatprep.subr.bf16.mxu0 0
    %200 = vmatpush1.bf16.msra.mxu0 0
    %201 = vmatprep.subr.bf16.mxu0 0
    %202 = vmatpush1.bf16.msra.mxu0 0
    %203 = vmatprep.subr.bf16.mxu0 0
    %204 = vmatpush1.bf16.msra.mxu0 0
    %205 = vmatprep.subr.bf16.mxu0 0
    %206 = vmatpush1.bf16.msra.mxu0 0
    %207 = vmatprep.subr.bf16.mxu0 0
    %208 = vmatpush1.bf16.msra.mxu0 0
    %209 = vmatprep.subr.bf16.mxu0 0
    %210 = vmatpush1.bf16.msra.mxu0 0
    %211 = vmatprep.subr.bf16.mxu0 0
    %212 = vmatpush1.bf16.msra.mxu0 0
    %213 = vmatprep.subr.bf16.mxu0 0
    %214 = vmatpush1.bf16.msra.mxu0 0
    %215 = vmatprep.mubr.bf16.mxu0 0
    %216 = vmatmul.mubr.bf16.gmra.mrb[0].mxu0 %v181
    %v217 = vpop.f32.mrb[0].mxu0
    %v218 = vadd.f32 %v166, %v217
    %v219 = vpop.f32.mrb[0].mxu0
    %v220 = vpop.f32.mrb[0].mxu0
    %v221 = vpop.f32.mrb[0].mxu0
    %222 = vdwg.mxu0
    %vm223 = vcmp.gt.f32.partialorder %v218, 0.0
    %v224 = vmul.f32 %v218, 0.01
    %v225 = vsel %vm223, %v218, %v224
    %v226 = vld [vmem:[%s5] sm:$0xf]
    %v227 = vld [vmem:[%s5 + $0x4] sm:$0xf]
    %v228 = vld [vmem:[%s5 + $0x8] sm:$0xf]
    %v229 = vld [vmem:[%s5 + $0xc] sm:$0xf]
    %v230 = vld [vmem:[%s6] sm:$0x1]
    %v231 = vpack.c.bf16 %v225, %v225
    %v233 = vlaneseq
    %v234 = vshrl.u32 %v233, 7
    %v235 = vsub.s32 0, %v234
    %v236 = vrot.slane %v230, %v235
    %v242 = vunpack.c.l.b16 %v226
    %v243 = vunpack.c.l.b16 %v227
    %v244 = vunpack.c.l.b16 %v228
    %v245 = vunpack.c.l.b16 %v229
    %v246 = vpack.c.b16 %v243, %v242
    %v247 = vpack.c.b16 %v245, %v244
    %v251 = vsel %vm112, %v231, 0
    %253 = vmatprep.subr.bf16.mxu0 0
    %254 = vmatpush1.bf16.msra.mxu0 %v246
    %255 = vmatprep.subr.bf16.mxu0 0
    %256 = vmatpush1.bf16.msra.mxu0 %v247
    %257 = vmatprep.subr.bf16.mxu0 0
    %258 = vmatpush1.bf16.msra.mxu0 0
    %259 = vmatprep.subr.bf16.mxu0 0
    %260 = vmatpush1.bf16.msra.mxu0 0
    %261 = vmatprep.subr.bf16.mxu0 0
    %262 = vmatpush1.bf16.msra.mxu0 0
    %263 = vmatprep.subr.bf16.mxu0 0
    %264 = vmatpush1.bf16.msra.mxu0 0
    %265 = vmatprep.subr.bf16.mxu0 0
    %266 = vmatpush1.bf16.msra.mxu0 0
    %267 = vmatprep.subr.bf16.mxu0 0
    %268 = vmatpush1.bf16.msra.mxu0 0
    %269 = vmatprep.subr.bf16.mxu0 0
    %270 = vmatpush1.bf16.msra.mxu0 0
    %271 = vmatprep.subr.bf16.mxu0 0
    %272 = vmatpush1.bf16.msra.mxu0 0
    %273 = vmatprep.subr.bf16.mxu0 0
    %274 = vmatpush1.bf16.msra.mxu0 0
    %275 = vmatprep.subr.bf16.mxu0 0
    %276 = vmatpush1.bf16.msra.mxu0 0
    %277 = vmatprep.subr.bf16.mxu0 0
    %278 = vmatpush1.bf16.msra.mxu0 0
    %279 = vmatprep.subr.bf16.mxu0 0
    %280 = vmatpush1.bf16.msra.mxu0 0
    %281 = vmatprep.subr.bf16.mxu0 0
    %282 = vmatpush1.bf16.msra.mxu0 0
    %283 = vmatprep.subr.bf16.mxu0 0
    %284 = vmatpush1.bf16.msra.mxu0 0
    %285 = vmatprep.mubr.bf16.mxu0 0
    %286 = vmatmul.mubr.bf16.gmra.mrb[0].mxu0 %v251
    %v287 = vpop.f32.mrb[0].mxu0
    %v288 = vadd.f32 %v236, %v287
    %v289 = vpop.f32.mrb[0].mxu0
    %v290 = vpop.f32.mrb[0].mxu0
    %v291 = vpop.f32.mrb[0].mxu0
    %292 = vdwg.mxu0
    %vm293 = vcmp.gt.f32.partialorder %v288, 0.0
    %v294 = vmul.f32 %v288, 0.01
    %v295 = vsel %vm293, %v288, %v294
    %v296 = vld [vmem:[#allocation8] sm:$0xf]
    %v297 = vld [vmem:[#allocation8 + $0x4] sm:$0xf]
    %v298 = vld [vmem:[#allocation8 + $0x8] sm:$0xf]
    %v299 = vld [vmem:[#allocation8 + $0xc] sm:$0xf]
    %v300 = vld [vmem:[%s8] sm:$0x1]
    %v301 = vpack.c.bf16 %v295, %v295
    %v303 = vlaneseq
    %v304 = vshrl.u32 %v303, 7
    %v305 = vsub.s32 0, %v304
    %v306 = vrot.slane %v300, %v305
    %v312 = vunpack.c.l.b16 %v296
    %v313 = vunpack.c.l.b16 %v297
    %v314 = vunpack.c.l.b16 %v298
    %v315 = vunpack.c.l.b16 %v299
    %v316 = vpack.c.b16 %v313, %v312
    %v317 = vpack.c.b16 %v315, %v314
    %v321 = vsel %vm112, %v301, 0
    %323 = vmatprep.subr.bf16.mxu0 0
    %324 = vmatpush1.bf16.msra.mxu0 %v316
    %325 = vmatprep.subr.bf16.mxu0 0
    %326 = vmatpush1.bf16.msra.mxu0 %v317
    %327 = vmatprep.subr.bf16.mxu0 0
    %328 = vmatpush1.bf16.msra.mxu0 0
    %329 = vmatprep.subr.bf16.mxu0 0
    %330 = vmatpush1.bf16.msra.mxu0 0
    %331 = vmatprep.subr.bf16.mxu0 0
    %332 = vmatpush1.bf16.msra.mxu0 0
    %333 = vmatprep.subr.bf16.mxu0 0
    %334 = vmatpush1.bf16.msra.mxu0 0
    %335 = vmatprep.subr.bf16.mxu0 0
    %336 = vmatpush1.bf16.msra.mxu0 0
    %337 = vmatprep.subr.bf16.mxu0 0
    %338 = vmatpush1.bf16.msra.mxu0 0
    %339 = vmatprep.subr.bf16.mxu0 0
    %340 = vmatpush1.bf16.msra.mxu0 0
    %341 = vmatprep.subr.bf16.mxu0 0
    %342 = vmatpush1.bf16.msra.mxu0 0
    %343 = vmatprep.subr.bf16.mxu0 0
    %344 = vmatpush1.bf16.msra.mxu0 0
    %345 = vmatprep.subr.bf16.mxu0 0
    %346 = vmatpush1.bf16.msra.mxu0 0
    %347 = vmatprep.subr.bf16.mxu0 0
    %348 = vmatpush1.bf16.msra.mxu0 0
    %349 = vmatprep.subr.bf16.mxu0 0
    %350 = vmatpush1.bf16.msra.mxu0 0
    %351 = vmatprep.subr.bf16.mxu0 0
    %352 = vmatpush1.bf16.msra.mxu0 0
    %353 = vmatprep.subr.bf16.mxu0 0
    %354 = vmatpush1.bf16.msra.mxu0 0
    %355 = vmatprep.mubr.bf16.mxu0 0
    %356 = vmatmul.mubr.bf16.gmra.mrb[0].mxu0 %v321
    %v357 = vpop.f32.mrb[0].mxu0
    %v358 = vadd.f32 %v306, %v357
    %v359 = vpop.f32.mrb[0].mxu0
    %v360 = vpop.f32.mrb[0].mxu0
    %v361 = vpop.f32.mrb[0].mxu0
    %362 = vdwg.mxu0
    %363 = vst [vmem:[#allocation10] sm:$0xff] %v358
    // Predicated region
    $region54: #{_statenet_forward.1} parent=1 // pred_check
      _
    $region55: #{_statenet_forward.1} parent=1 // pred_check_branch
      %365 = sbr.rel (0) target = $region57
    $region56: #{_statenet_forward.1} parent=1 // pred_region
      %s367 = ssub.s32 128, 128
      %368 = vsyncadd [#allocation4], %s367
      %s370 = sshll.u32 [#allocation10], 4
      %s371 = int_to_ptr.vmem [resolvable:$true] %s370
      %373 = dma.vmem_to_hbm [thread:$0]  %s371, 128, %s9, [#allocation4]
    $region57: #{_statenet_forward.1} parent=1 // pred_fallthru
      _
    // Predicated region
    $region58: #{_statenet_forward.1} parent=1 // pred_check
      _
    $region59: #{_statenet_forward.1} parent=1 // pred_check_branch
      %375 = sbr.rel (0) target = $region61
    $region60: #{_statenet_forward.1} parent=1 // pred_region
      %376 = dma.done [#allocation4], 128
    $region61: #{_statenet_forward.1} parent=1 // pred_fallthru
      _
    %377 = vsyncpa [#allocation3], 1
    %378 = vsyncpa [#allocation6], 1
    %379 = vsyncpa [#allocation9], 1
    %380 = vsyncpa [#allocation4], 1

</llo_original>
